<compile_context>
chip_gen: v5e
topology: v5e:2x2
jax: 0.10.0
libtpu: 0.0.40
codegen_flags: <defaults>
</compile_context>

<pallas_src>
import jax
import jax.numpy as jnp
from jax.experimental import pallas as pl
from jax.experimental.pallas import tpu as pltpu

LANE = 128
SUBLANE = 8


def _round_up(x, m):
    return (x + m - 1) // m * m


def _actor_kernel(x_ref, w1_ref, b1_ref, w2_ref, b2_ref, w3_ref, b3_ref, out_ref):
    # fc1 -> relu  (f32 operands, f32 accumulate)
    h1 = jnp.dot(x_ref[...], w1_ref[...], preferred_element_type=jnp.float32)
    h1 = jnp.maximum(h1 + b1_ref[...], 0.0)
    # fc2 -> relu
    h2 = jnp.dot(h1, w2_ref[...], preferred_element_type=jnp.float32)
    h2 = jnp.maximum(h2 + b2_ref[...], 0.0)
    # mu -> tanh  (output last dim == n_actions; small masked vst is fine,
    # the vst slot has huge slack in this memory-bound kernel)
    mu = jnp.dot(h2, w3_ref[...], preferred_element_type=jnp.float32)
    out_ref[...] = jnp.tanh(mu + b3_ref[...]).astype(out_ref.dtype)


def prepare_actor_params(w1, b1, w2, b2, w3, b3):
    """One-time parameter prep (hoisted out of the per-call path).

    Weights are (in, out) layout (transposed vs. PyTorch); biases are (out,).
    Hidden dims are zero-padded to the 128-lane width (VMEM-resident only);
    input and action dims stay unpadded so no HBM-touching array is padded.
    Zero padding is exact: padded h1/h2 columns are relu(0)=0 and padded
    weight rows are 0, so they never contribute to the real outputs.
    """
    in_dims, fc1 = w1.shape
    fc2 = w2.shape[1]
    n_act = w3.shape[1]
    fc1_p = _round_up(fc1, LANE)
    fc2_p = _round_up(fc2, LANE)

    f32 = jnp.float32
    w1_p = jnp.pad(w1.astype(f32), ((0, 0), (0, fc1_p - fc1)))
    b1_p = jnp.pad(b1.astype(f32), (0, fc1_p - fc1)).reshape(1, fc1_p)
    w2_p = jnp.pad(w2.astype(f32), ((0, fc1_p - fc1), (0, fc2_p - fc2)))
    b2_p = jnp.pad(b2.astype(f32), (0, fc2_p - fc2)).reshape(1, fc2_p)
    w3_p = jnp.pad(w3.astype(f32), ((0, fc2_p - fc2), (0, 0)))
    b3_p = b3.astype(f32).reshape(1, n_act)
    return (w1_p, b1_p, w2_p, b2_p, w3_p, b3_p)


def actor_forward(state, params, *, tile_b=1024):
    """Fused forward of the TD3 actor MLP.

    `params` is the tuple returned by prepare_actor_params().
    Returns float32 (B, n_actions).
    """
    w1_p, b1_p, w2_p, b2_p, w3_p, b3_p = params
    B, in_dims = state.shape
    assert in_dims == w1_p.shape[0]
    fc1_p = w1_p.shape[1]
    fc2_p = w2_p.shape[1]
    n_act = w3_p.shape[1]

    # Batch tiling: round to sublane, shrink for tiny batches, and cap so the
    # "parallel" axis has >= 2 grid steps for batches >= 16 rows (v7x has two
    # TensorCores; a 1-step grid would idle one of them).
    b_rounded = _round_up(max(B, 1), SUBLANE)
    tile_b = _round_up(max(min(tile_b, b_rounded), SUBLANE), SUBLANE)
    if b_rounded >= 2 * SUBLANE:
        tile_b = min(tile_b, _round_up(pl.cdiv(b_rounded, 2), SUBLANE))
    b_pad = _round_up(B, tile_b)
    grid = (b_pad // tile_b,)

    x = state.astype(jnp.float32)
    if b_pad != B:
        # Padded rows compute relu(b)/tanh(b) garbage; they are sliced off
        # below -- never reduce over the padded output.
        x = jnp.pad(x, ((0, b_pad - B), (0, 0)))

    param_bytes = (w1_p.size + b1_p.size + w2_p.size + b2_p.size
                   + w3_p.size + b3_p.size) * 4
    cost = pl.CostEstimate(
        flops=2 * b_pad * (in_dims * fc1_p + fc1_p * fc2_p + fc2_p * n_act),
        transcendentals=b_pad * n_act,
        bytes_accessed=b_pad * in_dims * 4 + param_bytes + b_pad * n_act * 4,
    )

    const = lambda i: (0, 0)
    out = pl.pallas_call(
        _actor_kernel,
        out_shape=jax.ShapeDtypeStruct((b_pad, n_act), jnp.float32),
        grid=grid,
        in_specs=[
            pl.BlockSpec((tile_b, in_dims), lambda i: (i, 0)),  # x tile (pipelined)
            pl.BlockSpec((in_dims, fc1_p), const),              # W1 (resident)
            pl.BlockSpec((1, fc1_p), const),                    # b1
            pl.BlockSpec((fc1_p, fc2_p), const),                # W2
            pl.BlockSpec((1, fc2_p), const),                    # b2
            pl.BlockSpec((fc2_p, n_act), const),                # W3
            pl.BlockSpec((1, n_act), const),                    # b3
        ],
        out_specs=pl.BlockSpec((tile_b, n_act), lambda i: (i, 0)),
        compiler_params=pltpu.CompilerParams(
            dimension_semantics=("parallel",),
        ),
        cost_estimate=cost,
    )(x, w1_p, b1_p, w2_p, b2_p, w3_p, b3_p)

    if b_pad != B:
        out = out[:B]
    return out


def init_linear_params(key, fan_in, fan_out):
    """PyTorch-style nn.Linear init: U(+/- 1/sqrt(fan_in)).

    Weight returned in (in, out) layout (transposed vs. PyTorch); bias (out,).
    """
    k_w, k_b = jax.random.split(key)
    bound = 1.0 / jnp.sqrt(jnp.float32(fan_in))
    w = jax.random.uniform(k_w, (fan_in, fan_out), jnp.float32, -bound, bound)
    b = jax.random.uniform(k_b, (fan_out,), jnp.float32, -bound, bound)
    return w, b


def reference_forward(state, w1, b1, w2, b2, w3, b3):
    h1 = jax.nn.relu(state @ w1 + b1)
    h2 = jax.nn.relu(h1 @ w2 + b2)
    return jnp.tanh(h2 @ w3 + b3)


if __name__ == "__main__":
    # Shapes consistent with the module: ActorNetwork(input_dims=(8,),
    # fc1_dims=32, fc2_dims=32, n_actions=4), batch=2.
    batch = 2
    input_dims = 8
    fc1_dims = 32
    fc2_dims = 32
    n_actions = 4

    key = jax.random.PRNGKey(0)
    k_state, k1, k2, k3, k_big = jax.random.split(key, 5)

    state = jax.random.normal(k_state, (batch, input_dims), jnp.float32)
    w1, b1 = init_linear_params(k1, input_dims, fc1_dims)
    w2, b2 = init_linear_params(k2, fc1_dims, fc2_dims)
    w3, b3 = init_linear_params(k3, fc2_dims, n_actions)

    # Parameter padding/casting is done once here, not per forward call.
    params = prepare_actor_params(w1, b1, w2, b2, w3, b3)

    # Small-batch run (single 8-row tile).
    mu = actor_forward(state, params)
    mu = jax.block_until_ready(mu)
    mu_ref = reference_forward(state, w1, b1, w2, b2, w3, b3)
    assert mu.shape == (batch, n_actions)
    # f32 operands throughout; loose tolerance only to cover MXU default
    # precision differences vs. the XLA reference matmuls.
    assert jnp.allclose(mu, mu_ref, atol=1e-2, rtol=1e-2)

    # Larger batch exercising the multi-step batch grid (tile_b=128 -> 3 tiles).
    big_b = 300
    big_state = jax.random.normal(k_big, (big_b, input_dims), jnp.float32)
    mu_big = actor_forward(big_state, params, tile_b=128)
    mu_big = jax.block_until_ready(mu_big)
    mu_big_ref = reference_forward(big_state, w1, b1, w2, b2, w3, b3)
    assert mu_big.shape == (big_b, n_actions)
    assert jnp.allclose(mu_big, mu_big_ref, atol=1e-2, rtol=1e-2)

    # TODO(synk): Adam optimizer / checkpoint save-load are training-side state
    # management with no kernel equivalent; only forward() is implemented.
    print("KERNEL_OK")
</pallas_src>

<mosaic_0001>
module attributes {stable_mosaic.version = 11 : i64} {
  func.func @_actor_kernel(%arg0: i32, %arg1: memref<8x8xf32, #tpu.memory_space<vmem>>, %arg2: memref<8x128xf32, #tpu.memory_space<vmem>>, %arg3: memref<1x128xf32, #tpu.memory_space<vmem>>, %arg4: memref<128x128xf32, #tpu.memory_space<vmem>>, %arg5: memref<1x128xf32, #tpu.memory_space<vmem>>, %arg6: memref<128x4xf32, #tpu.memory_space<vmem>>, %arg7: memref<1x4xf32, #tpu.memory_space<vmem>>, %arg8: memref<8x4xf32, #tpu.memory_space<vmem>>) attributes {dimension_semantics = [#tpu.dimension_semantics<parallel>], iteration_bounds = array<i64: 1>, scalar_prefetch = 0 : i64, scratch_operands = 0 : i64, tpu.core_type = #tpu.core_type<tc>, window_params = [{transform_indices = @transform_0, window_bounds = array<i64: 8, 8>}, {pipeline_mode = #tpu.pipeline_mode<synchronous>, transform_indices = @transform_1, window_bounds = array<i64: 8, 128>}, {pipeline_mode = #tpu.pipeline_mode<synchronous>, transform_indices = @transform_2, window_bounds = array<i64: 1, 128>}, {pipeline_mode = #tpu.pipeline_mode<synchronous>, transform_indices = @transform_3, window_bounds = array<i64: 128, 128>}, {pipeline_mode = #tpu.pipeline_mode<synchronous>, transform_indices = @transform_4, window_bounds = array<i64: 1, 128>}, {pipeline_mode = #tpu.pipeline_mode<synchronous>, transform_indices = @transform_5, window_bounds = array<i64: 128, 4>}, {pipeline_mode = #tpu.pipeline_mode<synchronous>, transform_indices = @transform_6, window_bounds = array<i64: 1, 4>}, {transform_indices = @transform_7, window_bounds = array<i64: 8, 4>}]} {
    %c0 = arith.constant 0 : index
    %c0_0 = arith.constant 0 : index
    %0 = vector.load %arg1[%c0, %c0_0] : memref<8x8xf32, #tpu.memory_space<vmem>>, vector<8x8xf32>
    %c0_1 = arith.constant 0 : index
    %c0_2 = arith.constant 0 : index
    %1 = vector.load %arg2[%c0_1, %c0_2] : memref<8x128xf32, #tpu.memory_space<vmem>>, vector<8x128xf32>
    %cst = arith.constant dense<0.000000e+00> : vector<8x128xf32>
    %2 = tpu.matmul %0, %1, %cst {dimension_numbers = #tpu.dot_dimension_numbers<[1], [0], [0], [1], [0, 0, 1, 1], [], []>} : vector<8x8xf32>, vector<8x128xf32>, vector<8x128xf32> -> vector<8x128xf32>
    %c0_3 = arith.constant 0 : index
    %c0_4 = arith.constant 0 : index
    %3 = vector.load %arg3[%c0_3, %c0_4] : memref<1x128xf32, #tpu.memory_space<vmem>>, vector<1x128xf32>
    %4 = vector.broadcast %3 : vector<1x128xf32> to vector<8x128xf32>
    %5 = arith.addf %2, %4 : vector<8x128xf32>
    %cst_5 = arith.constant 0.000000e+00 : f32
    %6 = vector.broadcast %cst_5 : f32 to vector<8x128xf32>
    %7 = arith.maximumf %5, %6 : vector<8x128xf32>
    %c0_6 = arith.constant 0 : index
    %c0_7 = arith.constant 0 : index
    %8 = vector.load %arg4[%c0_6, %c0_7] : memref<128x128xf32, #tpu.memory_space<vmem>>, vector<128x128xf32>
    %cst_8 = arith.constant dense<0.000000e+00> : vector<8x128xf32>
    %9 = tpu.matmul %7, %8, %cst_8 {dimension_numbers = #tpu.dot_dimension_numbers<[1], [0], [0], [1], [0, 0, 1, 1], [], []>} : vector<8x128xf32>, vector<128x128xf32>, vector<8x128xf32> -> vector<8x128xf32>
    %c0_9 = arith.constant 0 : index
    %c0_10 = arith.constant 0 : index
    %10 = vector.load %arg5[%c0_9, %c0_10] : memref<1x128xf32, #tpu.memory_space<vmem>>, vector<1x128xf32>
    %11 = vector.broadcast %10 : vector<1x128xf32> to vector<8x128xf32>
    %12 = arith.addf %9, %11 : vector<8x128xf32>
    %cst_11 = arith.constant 0.000000e+00 : f32
    %13 = vector.broadcast %cst_11 : f32 to vector<8x128xf32>
    %14 = arith.maximumf %12, %13 : vector<8x128xf32>
    %c0_12 = arith.constant 0 : index
    %c0_13 = arith.constant 0 : index
    %15 = vector.load %arg6[%c0_12, %c0_13] : memref<128x4xf32, #tpu.memory_space<vmem>>, vector<128x4xf32>
    %cst_14 = arith.constant dense<0.000000e+00> : vector<8x4xf32>
    %16 = tpu.matmul %14, %15, %cst_14 {dimension_numbers = #tpu.dot_dimension_numbers<[1], [0], [0], [1], [0, 0, 1, 1], [], []>} : vector<8x128xf32>, vector<128x4xf32>, vector<8x4xf32> -> vector<8x4xf32>
    %c0_15 = arith.constant 0 : index
    %c0_16 = arith.constant 0 : index
    %17 = vector.load %arg7[%c0_15, %c0_16] : memref<1x4xf32, #tpu.memory_space<vmem>>, vector<1x4xf32>
    %18 = vector.broadcast %17 : vector<1x4xf32> to vector<8x4xf32>
    %19 = arith.addf %16, %18 : vector<8x4xf32>
    %20 = math.tanh %19 : vector<8x4xf32>
    %c0_17 = arith.constant 0 : index
    %c0_18 = arith.constant 0 : index
    %21 = vector.load %arg8[%c0_17, %c0_18] : memref<8x4xf32, #tpu.memory_space<vmem>>, vector<8x4xf32>
    tpu.vector_store %arg8[%c0_17, %c0_18], %20 {strides = array<i32>} : memref<8x4xf32, #tpu.memory_space<vmem>>, vector<8x4xf32>,
    return
  }
  func.func @transform_0(%arg0: i32) -> (i32, i32) {
    %c0_i32 = arith.constant 0 : i32
    %c0_i32_0 = arith.constant 0 : i32
    return %arg0, %c0_i32 : i32, i32
  }
  func.func @transform_1(%arg0: i32) -> (i32, i32) {
    %c0_i32 = arith.constant 0 : i32
    %c0_i32_0 = arith.constant 0 : i32
    %c0_i32_1 = arith.constant 0 : i32
    return %c0_i32, %c0_i32_0 : i32, i32
  }
  func.func @transform_2(%arg0: i32) -> (i32, i32) {
    %c0_i32 = arith.constant 0 : i32
    %c0_i32_0 = arith.constant 0 : i32
    %c0_i32_1 = arith.constant 0 : i32
    return %c0_i32, %c0_i32_0 : i32, i32
  }
  func.func @transform_3(%arg0: i32) -> (i32, i32) {
    %c0_i32 = arith.constant 0 : i32
    %c0_i32_0 = arith.constant 0 : i32
    %c0_i32_1 = arith.constant 0 : i32
    return %c0_i32, %c0_i32_0 : i32, i32
  }
  func.func @transform_4(%arg0: i32) -> (i32, i32) {
    %c0_i32 = arith.constant 0 : i32
    %c0_i32_0 = arith.constant 0 : i32
    %c0_i32_1 = arith.constant 0 : i32
    return %c0_i32, %c0_i32_0 : i32, i32
  }
  func.func @transform_5(%arg0: i32) -> (i32, i32) {
    %c0_i32 = arith.constant 0 : i32
    %c0_i32_0 = arith.constant 0 : i32
    %c0_i32_1 = arith.constant 0 : i32
    return %c0_i32, %c0_i32_0 : i32, i32
  }
  func.func @transform_6(%arg0: i32) -> (i32, i32) {
    %c0_i32 = arith.constant 0 : i32
    %c0_i32_0 = arith.constant 0 : i32
    %c0_i32_1 = arith.constant 0 : i32
    return %c0_i32, %c0_i32_0 : i32, i32
  }
  func.func @transform_7(%arg0: i32) -> (i32, i32) {
    %c0_i32 = arith.constant 0 : i32
    %c0_i32_0 = arith.constant 0 : i32
    return %arg0, %c0_i32 : i32, i32
  }
}

</mosaic_0001>

<llo_original>
// kernel: tpu_custom_call.1
$region0: #{tpu_custom_call.1}
  #allocation0 [shape = 'u32[]', space=smem, size = 0x4, offset = 0x4, fixed_abs, tag = 'smem constant byte address 0x4 - core index']
  #allocation1 [shape = 'u32[72,128]{1,0:T(1,128)}', space=vmem, size = 0x9000, scoped, tag = 'internal scratch']
  %s0 = inlined_call_operand.hbm [shape: f32[8,8], index: 0, kind: input, shape index: {}]
  %s1 = inlined_call_operand.hbm [shape: f32[8,128], index: 1, kind: input, shape index: {}]
  %s2 = inlined_call_operand.vmem [shape: f32[1,128], index: 2, kind: input, shape index: {}]
  %s3 = inlined_call_operand.vmem [shape: f32[128,128], index: 3, kind: input, shape index: {}]
  %s4 = inlined_call_operand.vmem [shape: f32[1,128], index: 4, kind: input, shape index: {}]
  %s5 = inlined_call_operand.vmem [shape: f32[128,4], index: 5, kind: input, shape index: {}]
  %s6 = inlined_call_operand.vmem [shape: f32[1,4], index: 6, kind: input, shape index: {}]
  %s7 = inlined_call_operand.vmem [shape: f32[8,4], index: 7, kind: output, shape index: {}]
  %s8 = sld [smem:[#allocation0]]
  $region46: #{tpu_custom_call.1} parent=0
    _
  %s10 = ssub.s32 1, %s8
  %s11 = scalar_select 0, %s10, %s8
  $region1: #{tpu_custom_call.1} parent=0
    #allocation2 [shape = 'u8[4096]{0}', space=vmem, size = 0x1000, scoped, tag = 'input window, operand 0, single buffered']
    #allocation3 [shape = 's32[1]{0}', space=sflag, size = 0x4, scoped, tag = 'scoped memory for tpu_custom_call.1']
    #allocation4 [shape = 'u8[4096]{0}', space=vmem, size = 0x1000, scoped, tag = 'input window, operand 1, single buffered']
    #allocation5 [shape = 's32[1]{0}', space=sflag, size = 0x4, scoped, tag = 'scoped memory for tpu_custom_call.1']
    %12 = vsyncpa [#allocation3], 0
    %13 = vsyncpa [#allocation5], 0
    // Predicated region
    $region2: #{tpu_custom_call.1} parent=1 // pred_check
      _
    $region3: #{tpu_custom_call.1} parent=1 // pred_check_branch
      %15 = sbr.rel (0) target = $region5
    $region4: #{tpu_custom_call.1} parent=1 // pred_region
      %17 = vsyncadd [#allocation3], 0
      %s19 = sshll.u32 %s0, 4
      %s20 = int_to_ptr.hbm [resolvable:$true] %s19
      %s21 = sshll.u32 [#allocation2], 4
      %s22 = int_to_ptr.vmem [resolvable:$true] %s21
      %24 = dma.hbm_to_vmem [thread:$0]  %s20, 128, %s22, [#allocation3]
    $region5: #{tpu_custom_call.1} parent=1 // pred_fallthru
      _
    // Predicated region
    $region6: #{tpu_custom_call.1} parent=1 // pred_check
      _
    $region7: #{tpu_custom_call.1} parent=1 // pred_check_branch
      %26 = sbr.rel (0) target = $region9
    $region8: #{tpu_custom_call.1} parent=1 // pred_region
      %28 = vsyncadd [#allocation5], 0
      %s30 = sshll.u32 %s1, 4
      %s31 = int_to_ptr.hbm [resolvable:$true] %s30
      %s32 = sshll.u32 [#allocation4], 4
      %s33 = int_to_ptr.vmem [resolvable:$true] %s32
      %35 = dma.hbm_to_vmem [thread:$0]  %s31, 128, %s33, [#allocation5]
    $region9: #{tpu_custom_call.1} parent=1 // pred_fallthru
      _
    // Predicated region
    $region10: #{tpu_custom_call.1} parent=1 // pred_check
      _
    $region11: #{tpu_custom_call.1} parent=1 // pred_check_branch
      %37 = sbr.rel (0) target = $region13
    $region12: #{tpu_custom_call.1} parent=1 // pred_region
      _
    $region13: #{tpu_custom_call.1} parent=1 // pred_fallthru
      _
    // Predicated region
    $region14: #{tpu_custom_call.1} parent=1 // pred_check
      _
    $region15: #{tpu_custom_call.1} parent=1 // pred_check_branch
      %39 = sbr.rel (0) target = $region17
    $region16: #{tpu_custom_call.1} parent=1 // pred_region
      _
    $region17: #{tpu_custom_call.1} parent=1 // pred_fallthru
      _
    // Predicated region
    $region18: #{tpu_custom_call.1} parent=1 // pred_check
      _
    $region19: #{tpu_custom_call.1} parent=1 // pred_check_branch
      %41 = sbr.rel (0) target = $region21
    $region20: #{tpu_custom_call.1} parent=1 // pred_region
      _
    $region21: #{tpu_custom_call.1} parent=1 // pred_fallthru
      _
    // Predicated region
    $region22: #{tpu_custom_call.1} parent=1 // pred_check
      _
    $region23: #{tpu_custom_call.1} parent=1 // pred_check_branch
      %43 = sbr.rel (0) target = $region25
    $region24: #{tpu_custom_call.1} parent=1 // pred_region
      _
    $region25: #{tpu_custom_call.1} parent=1 // pred_fallthru
      _
    // Predicated region
    $region26: #{tpu_custom_call.1} parent=1 // pred_check
      _
    $region27: #{tpu_custom_call.1} parent=1 // pred_check_branch
      %45 = sbr.rel (0) target = $region29
    $region28: #{tpu_custom_call.1} parent=1 // pred_region
      _
    $region29: #{tpu_custom_call.1} parent=1 // pred_fallthru
      _
    // Predicated region
    $region30: #{tpu_custom_call.1} parent=1 // pred_check
      _
    $region31: #{tpu_custom_call.1} parent=1 // pred_check_branch
      %47 = sbr.rel (0) target = $region33
    $region32: #{tpu_custom_call.1} parent=1 // pred_region
      %49 = dma.done [#allocation3], 128
    $region33: #{tpu_custom_call.1} parent=1 // pred_fallthru
      _
    // Predicated region
    $region34: #{tpu_custom_call.1} parent=1 // pred_check
      _
    $region35: #{tpu_custom_call.1} parent=1 // pred_check_branch
      %51 = sbr.rel (0) target = $region37
    $region36: #{tpu_custom_call.1} parent=1 // pred_region
      %53 = dma.done [#allocation5], 128
    $region37: #{tpu_custom_call.1} parent=1 // pred_fallthru
      _
    %v54 = vld [vmem:[#allocation2] sm:$0xff]
    %v55 = vld [vmem:[#allocation4] sm:$0xff]
    %v56 = vld [vmem:[%s2] sm:$0x1]
    %v58 = vperm.slane %v56, 0
    %vm60 = vcmask 64512
    %v62 = vsel %vm60, %v54, 0
    %64 = vmatpush.msra.mxu0 0.0
    %65 = vmatpush.msra.mxu0 0.0
    %66 = vmatpush.msra.mxu0 0.0
    %67 = vmatpush.msra.mxu0 0.0
    %68 = vmatpush.msra.mxu0 0.0
    %69 = vmatpush.msra.mxu0 0.0
    %70 = vmatpush.msra.mxu0 0.0
    %71 = vmatpush.msra.mxu0 0.0
    %72 = vmatpush.msra.mxu0 0.0
    %73 = vmatpush.msra.mxu0 0.0
    %74 = vmatpush.msra.mxu0 0.0
    %75 = vmatpush.msra.mxu0 0.0
    %76 = vmatpush.msra.mxu0 0.0
    %77 = vmatpush.msra.mxu0 0.0
    %78 = vmatpush.msra.mxu0 0.0
    %79 = vmatpush.msra.mxu0 %v55
    %80 = vmatmul.f32.gmra.mxu0 %v62
    %v81 = vpop.f32.mrf.mxu0
    %v82 = vadd.f32 %v58, %v81
    %83 = vdwg.mxu0
    %v84 = vmax.f32 %v82, 0.0
    %v85 = vld [vmem:[%s3] sm:$0xff]
    %v86 = vld [vmem:[%s3 + $0x8] sm:$0xff]
    %v87 = vld [vmem:[%s3 + $0x10] sm:$0xff]
    %v88 = vld [vmem:[%s3 + $0x18] sm:$0xff]
    %v89 = vld [vmem:[%s3 + $0x20] sm:$0xff]
    %v90 = vld [vmem:[%s3 + $0x28] sm:$0xff]
    %v91 = vld [vmem:[%s3 + $0x30] sm:$0xff]
    %v92 = vld [vmem:[%s3 + $0x38] sm:$0xff]
    %v93 = vld [vmem:[%s3 + $0x40] sm:$0xff]
    %v94 = vld [vmem:[%s3 + $0x48] sm:$0xff]
    %v95 = vld [vmem:[%s3 + $0x50] sm:$0xff]
    %v96 = vld [vmem:[%s3 + $0x58] sm:$0xff]
    %v97 = vld [vmem:[%s3 + $0x60] sm:$0xff]
    %v98 = vld [vmem:[%s3 + $0x68] sm:$0xff]
    %v99 = vld [vmem:[%s3 + $0x70] sm:$0xff]
    %v100 = vld [vmem:[%s3 + $0x78] sm:$0xff]
    %v101 = vld [vmem:[%s4] sm:$0x1]
    %v103 = vperm.slane %v101, 0
    %105 = vmatpush.msra.mxu0 %v100
    %106 = vmatpush.msra.mxu0 %v99
    %107 = vmatpush.msra.mxu0 %v98
    %108 = vmatpush.msra.mxu0 %v97
    %109 = vmatpush.msra.mxu0 %v96
    %110 = vmatpush.msra.mxu0 %v95
    %111 = vmatpush.msra.mxu0 %v94
    %112 = vmatpush.msra.mxu0 %v93
    %113 = vmatpush.msra.mxu0 %v92
    %114 = vmatpush.msra.mxu0 %v91
    %115 = vmatpush.msra.mxu0 %v90
    %116 = vmatpush.msra.mxu0 %v89
    %117 = vmatpush.msra.mxu0 %v88
    %118 = vmatpush.msra.mxu0 %v87
    %119 = vmatpush.msra.mxu0 %v86
    %120 = vmatpush.msra.mxu0 %v85
    %121 = vmatmul.f32.gmra.mxu0 %v84
    %v122 = vpop.f32.mrf.mxu0
    %v123 = vadd.f32 %v103, %v122
    %124 = vdwg.mxu0
    %v125 = vmax.f32 %v123, 0.0
    %v126 = vld [vmem:[%s5] sm:$0xff]
    %v127 = vld [vmem:[%s5 + $0x8] sm:$0xff]
    %v128 = vld [vmem:[%s5 + $0x10] sm:$0xff]
    %v129 = vld [vmem:[%s5 + $0x18] sm:$0xff]
    %v130 = vld [vmem:[%s5 + $0x20] sm:$0xff]
    %v131 = vld [vmem:[%s5 + $0x28] sm:$0xff]
    %v132 = vld [vmem:[%s5 + $0x30] sm:$0xff]
    %v133 = vld [vmem:[%s5 + $0x38] sm:$0xff]
    %v134 = vld [vmem:[%s5 + $0x40] sm:$0xff]
    %v135 = vld [vmem:[%s5 + $0x48] sm:$0xff]
    %v136 = vld [vmem:[%s5 + $0x50] sm:$0xff]
    %v137 = vld [vmem:[%s5 + $0x58] sm:$0xff]
    %v138 = vld [vmem:[%s5 + $0x60] sm:$0xff]
    %v139 = vld [vmem:[%s5 + $0x68] sm:$0xff]
    %v140 = vld [vmem:[%s5 + $0x70] sm:$0xff]
    %v141 = vld [vmem:[%s5 + $0x78] sm:$0xff]
    %v142 = vld [vmem:[%s6] sm:$0x1]
    %v144 = vperm.slane %v142, 0
    %146 = vmatpush.msra.mxu0 %v141
    %147 = vmatpush.msra.mxu0 %v140
    %148 = vmatpush.msra.mxu0 %v139
    %149 = vmatpush.msra.mxu0 %v138
    %150 = vmatpush.msra.mxu0 %v137
    %151 = vmatpush.msra.mxu0 %v136
    %152 = vmatpush.msra.mxu0 %v135
    %153 = vmatpush.msra.mxu0 %v134
    %154 = vmatpush.msra.mxu0 %v133
    %155 = vmatpush.msra.mxu0 %v132
    %156 = vmatpush.msra.mxu0 %v131
    %157 = vmatpush.msra.mxu0 %v130
    %158 = vmatpush.msra.mxu0 %v129
    %159 = vmatpush.msra.mxu0 %v128
    %160 = vmatpush.msra.mxu0 %v127
    %161 = vmatpush.msra.mxu0 %v126
    %162 = vmatmul.f32.gmra.mxu0 %v125
    %v163 = vpop.f32.mrf.mxu0
    %v164 = vadd.f32 %v144, %v163
    %165 = vdwg.mxu0
    %v166 = vtanh.pop %v164
    %vm167 = vcmask 31744
    %168 = vst.msk [vmem:[%s7] sm:$0xff] %vm167, %v166
    // Predicated region
    $region38: #{tpu_custom_call.1} parent=1 // pred_check
      _
    $region39: #{tpu_custom_call.1} parent=1 // pred_check_branch
      %170 = sbr.rel (0) target = $region41
    $region40: #{tpu_custom_call.1} parent=1 // pred_region
      _
    $region41: #{tpu_custom_call.1} parent=1 // pred_fallthru
      _
    // Predicated region
    $region42: #{tpu_custom_call.1} parent=1 // pred_check
      _
    $region43: #{tpu_custom_call.1} parent=1 // pred_check_branch
      %172 = sbr.rel (0) target = $region45
    $region44: #{tpu_custom_call.1} parent=1 // pred_region
      _
    $region45: #{tpu_custom_call.1} parent=1 // pred_fallthru
      _
    %173 = vsyncpa [#allocation3], 1
    %174 = vsyncpa [#allocation5], 1

</llo_original>
